<compile_context>
chip_gen: v7x
topology: tpu7x:2x2x1
jax: 0.10.0
libtpu: 0.0.40
codegen_flags: <defaults>
</compile_context>

<pallas_src>
import jax
import jax.numpy as jnp
from jax.experimental import pallas as pl
from jax.experimental.pallas import tpu as pltpu


def lstm_fc_kernel(x_ref, wih_ref, whh_ref, b_ref, wfc_ref, bfc_ref, out_ref):
    """Fused-gate LSTM recurrence + final linear head, all operands in VMEM.

    Shapes (all static):
      x_ref   : (T*Bp, D)  bf16, time-major, rows [t*Bp:(t+1)*Bp] are frame t
      wih_ref : (D, 4H)    bf16, gate-stacked columns [i | f | g | o]
      whh_ref : (H, 4H)    bf16
      b_ref   : (1, 4H)    f32, combined b_ih + b_hh
      wfc_ref : (H, Cp)    bf16, lane-padded (zero cols past C)
      bfc_ref : (1, Cp)    f32, lane-padded
      out_ref : (Bp, Cp)   f32
    """
    H = whh_ref.shape[0]
    Bp = out_ref.shape[0]
    T = x_ref.shape[0] // Bp

    # (1) Input projection has no serial dependence: one big lane-dense MXU pass
    #     (bf16 operands, f32 accumulate).
    xw = jnp.dot(x_ref[...], wih_ref[...],
                 preferred_element_type=jnp.float32)           # (T*Bp, 4H) f32
    # (2) Fold the combined bias in once, off the serial recurrence path.
    xw = xw + b_ref[...]

    # Hoist recurrent weights out of the loop (no re-load / re-broadcast).
    w_hh = whh_ref[...]                                         # (H, 4H) bf16

    h = jnp.zeros((Bp, H), jnp.float32)
    c = jnp.zeros((Bp, H), jnp.float32)

    # (3) Fully unrolled static loop: one fused (Bp,H)x(H,4H) bf16 MXU matmul per
    #     step, two full-width EUP pushes, static sublane-aligned frame slices.
    #     Gate column order follows PyTorch: [i | f | g | o].
    for t in range(T):
        pre = xw[t * Bp:(t + 1) * Bp] + jnp.dot(
            h.astype(jnp.bfloat16), w_hh,
            preferred_element_type=jnp.float32)                 # (Bp, 4H) f32
        sig = jax.nn.sigmoid(pre)                               # one EUP pass
        tnh = jnp.tanh(pre)                                     # one EUP pass
        i_g = sig[:, 0 * H:1 * H]
        f_g = sig[:, 1 * H:2 * H]
        g_g = tnh[:, 2 * H:3 * H]
        o_g = sig[:, 3 * H:4 * H]
        c = f_g * c + i_g * g_g
        h = o_g * jnp.tanh(c)

    logits = jnp.dot(h.astype(jnp.bfloat16), wfc_ref[...],
                     preferred_element_type=jnp.float32) + bfc_ref[...]
    out_ref[...] = logits.astype(out_ref.dtype)                 # lane-dense store


def init_params(key, input_dim, hidden_dim, num_classes):
    """Deterministic init mirroring PyTorch's uniform(-1/sqrt(H), 1/sqrt(H))."""
    k = 1.0 / jnp.sqrt(jnp.float32(hidden_dim))
    keys = jax.random.split(key, 6)
    u = lambda kk, shape: jax.random.uniform(kk, shape, jnp.float32, -k, k)
    return {
        "w_ih": u(keys[0], (4, input_dim, hidden_dim)),   # gates (i, f, g, o)
        "w_hh": u(keys[1], (4, hidden_dim, hidden_dim)),
        "b_ih": u(keys[2], (4, hidden_dim)),
        "b_hh": u(keys[3], (4, hidden_dim)),
        "w_fc": u(keys[4], (hidden_dim, num_classes)),
        "b_fc": u(keys[5], (num_classes,)),
    }


def prepare_params(params):
    """One-time (per-checkpoint) layout prep so the per-call kernel inputs are
    already lane-dense / gate-stacked / bf16.  Hoisted out of the forward."""
    D = params["w_ih"].shape[1]
    H = params["w_hh"].shape[2]
    C = params["w_fc"].shape[1]
    Cp = max(128, ((C + 127) // 128) * 128)                 # lane-dense fc output

    w_ih = jnp.transpose(params["w_ih"], (1, 0, 2)).reshape(D, 4 * H)
    w_hh = jnp.transpose(params["w_hh"], (1, 0, 2)).reshape(H, 4 * H)
    b = (params["b_ih"] + params["b_hh"]).reshape(1, 4 * H).astype(jnp.float32)

    w_fc = jnp.zeros((H, Cp), jnp.bfloat16).at[:, :C].set(
        params["w_fc"].astype(jnp.bfloat16))
    b_fc = jnp.zeros((1, Cp), jnp.float32).at[:, :C].set(
        params["b_fc"].astype(jnp.float32))

    return {
        "w_ih": w_ih.astype(jnp.bfloat16),
        "w_hh": w_hh.astype(jnp.bfloat16),
        "b": b,
        "w_fc": w_fc,
        "b_fc": b_fc,
        "hidden_dim": H,
        "num_classes": C,
    }


def video_only_model_forward(x, prep):
    """x: (B, T, D) batch-first, like the PyTorch module. Returns (B, C) logits."""
    B, T, D = x.shape
    Cp = prep["w_fc"].shape[1]
    C = prep["num_classes"]
    Bp = ((B + 7) // 8) * 8                                 # sublane-aligned batch

    # Time-major, batch zero-padded to a sublane multiple, bf16 MXU operand.
    # (At real sizes: skip this materialized transpose and use a BlockSpec
    #  index_map over a T grid axis to fetch frames straight from HBM.)
    x_tm = jnp.zeros((T, Bp, D), jnp.bfloat16)
    x_tm = x_tm.at[:, :B, :].set(jnp.transpose(x, (1, 0, 2)).astype(jnp.bfloat16))
    x_tm = x_tm.reshape(T * Bp, D)

    vmem = pl.BlockSpec(memory_space=pltpu.MemorySpace.VMEM)
    out = pl.pallas_call(
        lstm_fc_kernel,
        out_shape=jax.ShapeDtypeStruct((Bp, Cp), jnp.float32),
        in_specs=[vmem] * 6,
        out_specs=vmem,
    )(x_tm, prep["w_ih"], prep["w_hh"], prep["b"], prep["w_fc"], prep["b_fc"])
    return out[:B, :C]


def reference_forward(x, params, matmul_dtype=jnp.float32):
    """Pure-JAX reference of the same LSTM + Linear math (for validation).
    matmul_dtype=bf16 mirrors the kernel's MXU-operand precision exactly."""
    B, T, D = x.shape
    H = params["w_hh"].shape[2]
    dt = matmul_dtype
    h = jnp.zeros((B, H), jnp.float32)
    c = jnp.zeros((B, H), jnp.float32)
    b = params["b_ih"] + params["b_hh"]
    mm = lambda a, w: jnp.dot(a.astype(dt), w.astype(dt),
                              preferred_element_type=jnp.float32)
    for t in range(T):
        xt = x[:, t, :]
        i_g = jax.nn.sigmoid(mm(xt, params["w_ih"][0]) + mm(h, params["w_hh"][0]) + b[0])
        f_g = jax.nn.sigmoid(mm(xt, params["w_ih"][1]) + mm(h, params["w_hh"][1]) + b[1])
        g_g = jnp.tanh(mm(xt, params["w_ih"][2]) + mm(h, params["w_hh"][2]) + b[2])
        o_g = jax.nn.sigmoid(mm(xt, params["w_ih"][3]) + mm(h, params["w_hh"][3]) + b[3])
        c = f_g * c + i_g * g_g
        h = o_g * jnp.tanh(c)
    return mm(h, params["w_fc"]) + params["b_fc"]


if __name__ == "__main__":
    # Small shapes implied by forward(): x is (batch, num_frames, input_dim).
    batch, num_frames, input_dim = 2, 8, 16
    hidden_dim, num_classes = 32, 4

    key = jax.random.PRNGKey(0)
    k_x, k_p = jax.random.split(key)
    x = jax.random.normal(k_x, (batch, num_frames, input_dim), jnp.float32)
    params = init_params(k_p, input_dim, hidden_dim, num_classes)
    prep = prepare_params(params)          # one-time layout prep (hoisted)

    logits = video_only_model_forward(x, prep)
    logits = jax.block_until_ready(logits)
    assert logits.shape == (batch, num_classes)

    # Tight check vs a reference that uses the same bf16 MXU-operand precision.
    ref_bf16 = reference_forward(x, params, matmul_dtype=jnp.bfloat16)
    assert jnp.allclose(logits, ref_bf16, atol=1e-3, rtol=1e-3), \
        "mismatch vs bf16-matched pure-JAX reference"

    # Looser check vs the true full-f32 module semantics (bf16 operand error only).
    ref_f32 = reference_forward(x, params, matmul_dtype=jnp.float32)
    assert jnp.allclose(logits, ref_f32, atol=5e-2, rtol=5e-2), \
        "mismatch vs full-f32 pure-JAX reference"

    print("KERNEL_OK")
</pallas_src>

<mosaic_0001>
module attributes {stable_mosaic.version = 11 : i64} {
  func.func @lstm_fc_kernel(%arg0: memref<64x16xbf16, #tpu.memory_space<vmem>>, %arg1: memref<16x128xbf16, #tpu.memory_space<vmem>>, %arg2: memref<32x128xbf16, #tpu.memory_space<vmem>>, %arg3: memref<1x128xf32, #tpu.memory_space<vmem>>, %arg4: memref<32x128xbf16, #tpu.memory_space<vmem>>, %arg5: memref<1x128xf32, #tpu.memory_space<vmem>>, %arg6: memref<8x128xf32, #tpu.memory_space<vmem>>) attributes {dimension_semantics = [], scalar_prefetch = 0 : i64, scratch_operands = 0 : i64, tpu.core_type = #tpu.core_type<tc>} {
    %c0 = arith.constant 0 : index
    %c0_0 = arith.constant 0 : index
    %0 = vector.load %arg0[%c0, %c0_0] : memref<64x16xbf16, #tpu.memory_space<vmem>>, vector<64x16xbf16>
    %c0_1 = arith.constant 0 : index
    %c0_2 = arith.constant 0 : index
    %1 = vector.load %arg1[%c0_1, %c0_2] : memref<16x128xbf16, #tpu.memory_space<vmem>>, vector<16x128xbf16>
    %cst = arith.constant dense<0.000000e+00> : vector<64x128xf32>
    %2 = tpu.matmul %0, %1, %cst {dimension_numbers = #tpu.dot_dimension_numbers<[1], [0], [0], [1], [0, 0, 1, 1], [], []>} : vector<64x16xbf16>, vector<16x128xbf16>, vector<64x128xf32> -> vector<64x128xf32>
    %c0_3 = arith.constant 0 : index
    %c0_4 = arith.constant 0 : index
    %3 = vector.load %arg3[%c0_3, %c0_4] : memref<1x128xf32, #tpu.memory_space<vmem>>, vector<1x128xf32>
    %4 = vector.broadcast %3 : vector<1x128xf32> to vector<64x128xf32>
    %5 = arith.addf %2, %4 : vector<64x128xf32>
    %c0_5 = arith.constant 0 : index
    %c0_6 = arith.constant 0 : index
    %6 = vector.load %arg2[%c0_5, %c0_6] : memref<32x128xbf16, #tpu.memory_space<vmem>>, vector<32x128xbf16>
    %cst_7 = arith.constant 0.000000e+00 : f32
    %7 = vector.broadcast %cst_7 : f32 to vector<8x32xf32>
    %cst_8 = arith.constant 0.000000e+00 : f32
    %8 = vector.broadcast %cst_8 : f32 to vector<8x32xf32>
    %9 = vector.extract_strided_slice %5 {offsets = [0, 0], sizes = [8, 128], strides = [1, 1]} : vector<64x128xf32> to vector<8x128xf32>
    %10 = arith.truncf %7 : vector<8x32xf32> to vector<8x32xbf16>
    %cst_9 = arith.constant dense<0.000000e+00> : vector<8x128xf32>
    %11 = tpu.matmul %10, %6, %cst_9 {dimension_numbers = #tpu.dot_dimension_numbers<[1], [0], [0], [1], [0, 0, 1, 1], [], []>} : vector<8x32xbf16>, vector<32x128xbf16>, vector<8x128xf32> -> vector<8x128xf32>
    %12 = arith.addf %9, %11 : vector<8x128xf32>
    %13 = arith.negf %12 : vector<8x128xf32>
    %14 = math.exp %13 : vector<8x128xf32>
    %cst_10 = arith.constant 1.000000e+00 : f32
    %15 = vector.broadcast %cst_10 : f32 to vector<8x128xf32>
    %16 = arith.addf %15, %14 : vector<8x128xf32>
    %17 = arith.divf %15, %16 : vector<8x128xf32>
    %18 = math.tanh %12 : vector<8x128xf32>
    %19 = vector.extract_strided_slice %17 {offsets = [0, 0], sizes = [8, 32], strides = [1, 1]} : vector<8x128xf32> to vector<8x32xf32>
    %20 = vector.extract_strided_slice %17 {offsets = [0, 32], sizes = [8, 32], strides = [1, 1]} : vector<8x128xf32> to vector<8x32xf32>
    %21 = vector.extract_strided_slice %18 {offsets = [0, 64], sizes = [8, 32], strides = [1, 1]} : vector<8x128xf32> to vector<8x32xf32>
    %22 = vector.extract_strided_slice %17 {offsets = [0, 96], sizes = [8, 32], strides = [1, 1]} : vector<8x128xf32> to vector<8x32xf32>
    %23 = arith.mulf %20, %8 : vector<8x32xf32>
    %24 = arith.mulf %19, %21 : vector<8x32xf32>
    %25 = arith.addf %23, %24 : vector<8x32xf32>
    %26 = math.tanh %25 : vector<8x32xf32>
    %27 = arith.mulf %22, %26 : vector<8x32xf32>
    %28 = vector.extract_strided_slice %5 {offsets = [8, 0], sizes = [8, 128], strides = [1, 1]} : vector<64x128xf32> to vector<8x128xf32>
    %29 = arith.truncf %27 : vector<8x32xf32> to vector<8x32xbf16>
    %cst_11 = arith.constant dense<0.000000e+00> : vector<8x128xf32>
    %30 = tpu.matmul %29, %6, %cst_11 {dimension_numbers = #tpu.dot_dimension_numbers<[1], [0], [0], [1], [0, 0, 1, 1], [], []>} : vector<8x32xbf16>, vector<32x128xbf16>, vector<8x128xf32> -> vector<8x128xf32>
    %31 = arith.addf %28, %30 : vector<8x128xf32>
    %32 = arith.negf %31 : vector<8x128xf32>
    %33 = math.exp %32 : vector<8x128xf32>
    %cst_12 = arith.constant 1.000000e+00 : f32
    %34 = vector.broadcast %cst_12 : f32 to vector<8x128xf32>
    %35 = arith.addf %34, %33 : vector<8x128xf32>
    %36 = arith.divf %34, %35 : vector<8x128xf32>
    %37 = math.tanh %31 : vector<8x128xf32>
    %38 = vector.extract_strided_slice %36 {offsets = [0, 0], sizes = [8, 32], strides = [1, 1]} : vector<8x128xf32> to vector<8x32xf32>
    %39 = vector.extract_strided_slice %36 {offsets = [0, 32], sizes = [8, 32], strides = [1, 1]} : vector<8x128xf32> to vector<8x32xf32>
    %40 = vector.extract_strided_slice %37 {offsets = [0, 64], sizes = [8, 32], strides = [1, 1]} : vector<8x128xf32> to vector<8x32xf32>
    %41 = vector.extract_strided_slice %36 {offsets = [0, 96], sizes = [8, 32], strides = [1, 1]} : vector<8x128xf32> to vector<8x32xf32>
    %42 = arith.mulf %39, %25 : vector<8x32xf32>
    %43 = arith.mulf %38, %40 : vector<8x32xf32>
    %44 = arith.addf %42, %43 : vector<8x32xf32>
    %45 = math.tanh %44 : vector<8x32xf32>
    %46 = arith.mulf %41, %45 : vector<8x32xf32>
    %47 = vector.extract_strided_slice %5 {offsets = [16, 0], sizes = [8, 128], strides = [1, 1]} : vector<64x128xf32> to vector<8x128xf32>
    %48 = arith.truncf %46 : vector<8x32xf32> to vector<8x32xbf16>
    %cst_13 = arith.constant dense<0.000000e+00> : vector<8x128xf32>
    %49 = tpu.matmul %48, %6, %cst_13 {dimension_numbers = #tpu.dot_dimension_numbers<[1], [0], [0], [1], [0, 0, 1, 1], [], []>} : vector<8x32xbf16>, vector<32x128xbf16>, vector<8x128xf32> -> vector<8x128xf32>
    %50 = arith.addf %47, %49 : vector<8x128xf32>
    %51 = arith.negf %50 : vector<8x128xf32>
    %52 = math.exp %51 : vector<8x128xf32>
    %cst_14 = arith.constant 1.000000e+00 : f32
    %53 = vector.broadcast %cst_14 : f32 to vector<8x128xf32>
    %54 = arith.addf %53, %52 : vector<8x128xf32>
    %55 = arith.divf %53, %54 : vector<8x128xf32>
    %56 = math.tanh %50 : vector<8x128xf32>
    %57 = vector.extract_strided_slice %55 {offsets = [0, 0], sizes = [8, 32], strides = [1, 1]} : vector<8x128xf32> to vector<8x32xf32>
    %58 = vector.extract_strided_slice %55 {offsets = [0, 32], sizes = [8, 32], strides = [1, 1]} : vector<8x128xf32> to vector<8x32xf32>
    %59 = vector.extract_strided_slice %56 {offsets = [0, 64], sizes = [8, 32], strides = [1, 1]} : vector<8x128xf32> to vector<8x32xf32>
    %60 = vector.extract_strided_slice %55 {offsets = [0, 96], sizes = [8, 32], strides = [1, 1]} : vector<8x128xf32> to vector<8x32xf32>
    %61 = arith.mulf %58, %44 : vector<8x32xf32>
    %62 = arith.mulf %57, %59 : vector<8x32xf32>
    %63 = arith.addf %61, %62 : vector<8x32xf32>
    %64 = math.tanh %63 : vector<8x32xf32>
    %65 = arith.mulf %60, %64 : vector<8x32xf32>
    %66 = vector.extract_strided_slice %5 {offsets = [24, 0], sizes = [8, 128], strides = [1, 1]} : vector<64x128xf32> to vector<8x128xf32>
    %67 = arith.truncf %65 : vector<8x32xf32> to vector<8x32xbf16>
    %cst_15 = arith.constant dense<0.000000e+00> : vector<8x128xf32>
    %68 = tpu.matmul %67, %6, %cst_15 {dimension_numbers = #tpu.dot_dimension_numbers<[1], [0], [0], [1], [0, 0, 1, 1], [], []>} : vector<8x32xbf16>, vector<32x128xbf16>, vector<8x128xf32> -> vector<8x128xf32>
    %69 = arith.addf %66, %68 : vector<8x128xf32>
    %70 = arith.negf %69 : vector<8x128xf32>
    %71 = math.exp %70 : vector<8x128xf32>
    %cst_16 = arith.constant 1.000000e+00 : f32
    %72 = vector.broadcast %cst_16 : f32 to vector<8x128xf32>
    %73 = arith.addf %72, %71 : vector<8x128xf32>
    %74 = arith.divf %72, %73 : vector<8x128xf32>
    %75 = math.tanh %69 : vector<8x128xf32>
    %76 = vector.extract_strided_slice %74 {offsets = [0, 0], sizes = [8, 32], strides = [1, 1]} : vector<8x128xf32> to vector<8x32xf32>
    %77 = vector.extract_strided_slice %74 {offsets = [0, 32], sizes = [8, 32], strides = [1, 1]} : vector<8x128xf32> to vector<8x32xf32>
    %78 = vector.extract_strided_slice %75 {offsets = [0, 64], sizes = [8, 32], strides = [1, 1]} : vector<8x128xf32> to vector<8x32xf32>
    %79 = vector.extract_strided_slice %74 {offsets = [0, 96], sizes = [8, 32], strides = [1, 1]} : vector<8x128xf32> to vector<8x32xf32>
    %80 = arith.mulf %77, %63 : vector<8x32xf32>
    %81 = arith.mulf %76, %78 : vector<8x32xf32>
    %82 = arith.addf %80, %81 : vector<8x32xf32>
    %83 = math.tanh %82 : vector<8x32xf32>
    %84 = arith.mulf %79, %83 : vector<8x32xf32>
    %85 = vector.extract_strided_slice %5 {offsets = [32, 0], sizes = [8, 128], strides = [1, 1]} : vector<64x128xf32> to vector<8x128xf32>
    %86 = arith.truncf %84 : vector<8x32xf32> to vector<8x32xbf16>
    %cst_17 = arith.constant dense<0.000000e+00> : vector<8x128xf32>
    %87 = tpu.matmul %86, %6, %cst_17 {dimension_numbers = #tpu.dot_dimension_numbers<[1], [0], [0], [1], [0, 0, 1, 1], [], []>} : vector<8x32xbf16>, vector<32x128xbf16>, vector<8x128xf32> -> vector<8x128xf32>
    %88 = arith.addf %85, %87 : vector<8x128xf32>
    %89 = arith.negf %88 : vector<8x128xf32>
    %90 = math.exp %89 : vector<8x128xf32>
    %cst_18 = arith.constant 1.000000e+00 : f32
    %91 = vector.broadcast %cst_18 : f32 to vector<8x128xf32>
    %92 = arith.addf %91, %90 : vector<8x128xf32>
    %93 = arith.divf %91, %92 : vector<8x128xf32>
    %94 = math.tanh %88 : vector<8x128xf32>
    %95 = vector.extract_strided_slice %93 {offsets = [0, 0], sizes = [8, 32], strides = [1, 1]} : vector<8x128xf32> to vector<8x32xf32>
    %96 = vector.extract_strided_slice %93 {offsets = [0, 32], sizes = [8, 32], strides = [1, 1]} : vector<8x128xf32> to vector<8x32xf32>
    %97 = vector.extract_strided_slice %94 {offsets = [0, 64], sizes = [8, 32], strides = [1, 1]} : vector<8x128xf32> to vector<8x32xf32>
    %98 = vector.extract_strided_slice %93 {offsets = [0, 96], sizes = [8, 32], strides = [1, 1]} : vector<8x128xf32> to vector<8x32xf32>
    %99 = arith.mulf %96, %82 : vector<8x32xf32>
    %100 = arith.mulf %95, %97 : vector<8x32xf32>
    %101 = arith.addf %99, %100 : vector<8x32xf32>
    %102 = math.tanh %101 : vector<8x32xf32>
    %103 = arith.mulf %98, %102 : vector<8x32xf32>
    %104 = vector.extract_strided_slice %5 {offsets = [40, 0], sizes = [8, 128], strides = [1, 1]} : vector<64x128xf32> to vector<8x128xf32>
    %105 = arith.truncf %103 : vector<8x32xf32> to vector<8x32xbf16>
    %cst_19 = arith.constant dense<0.000000e+00> : vector<8x128xf32>
    %106 = tpu.matmul %105, %6, %cst_19 {dimension_numbers = #tpu.dot_dimension_numbers<[1], [0], [0], [1], [0, 0, 1, 1], [], []>} : vector<8x32xbf16>, vector<32x128xbf16>, vector<8x128xf32> -> vector<8x128xf32>
    %107 = arith.addf %104, %106 : vector<8x128xf32>
    %108 = arith.negf %107 : vector<8x128xf32>
    %109 = math.exp %108 : vector<8x128xf32>
    %cst_20 = arith.constant 1.000000e+00 : f32
    %110 = vector.broadcast %cst_20 : f32 to vector<8x128xf32>
    %111 = arith.addf %110, %109 : vector<8x128xf32>
    %112 = arith.divf %110, %111 : vector<8x128xf32>
    %113 = math.tanh %107 : vector<8x128xf32>
    %114 = vector.extract_strided_slice %112 {offsets = [0, 0], sizes = [8, 32], strides = [1, 1]} : vector<8x128xf32> to vector<8x32xf32>
    %115 = vector.extract_strided_slice %112 {offsets = [0, 32], sizes = [8, 32], strides = [1, 1]} : vector<8x128xf32> to vector<8x32xf32>
    %116 = vector.extract_strided_slice %113 {offsets = [0, 64], sizes = [8, 32], strides = [1, 1]} : vector<8x128xf32> to vector<8x32xf32>
    %117 = vector.extract_strided_slice %112 {offsets = [0, 96], sizes = [8, 32], strides = [1, 1]} : vector<8x128xf32> to vector<8x32xf32>
    %118 = arith.mulf %115, %101 : vector<8x32xf32>
    %119 = arith.mulf %114, %116 : vector<8x32xf32>
    %120 = arith.addf %118, %119 : vector<8x32xf32>
    %121 = math.tanh %120 : vector<8x32xf32>
    %122 = arith.mulf %117, %121 : vector<8x32xf32>
    %123 = vector.extract_strided_slice %5 {offsets = [48, 0], sizes = [8, 128], strides = [1, 1]} : vector<64x128xf32> to vector<8x128xf32>
    %124 = arith.truncf %122 : vector<8x32xf32> to vector<8x32xbf16>
    %cst_21 = arith.constant dense<0.000000e+00> : vector<8x128xf32>
    %125 = tpu.matmul %124, %6, %cst_21 {dimension_numbers = #tpu.dot_dimension_numbers<[1], [0], [0], [1], [0, 0, 1, 1], [], []>} : vector<8x32xbf16>, vector<32x128xbf16>, vector<8x128xf32> -> vector<8x128xf32>
    %126 = arith.addf %123, %125 : vector<8x128xf32>
    %127 = arith.negf %126 : vector<8x128xf32>
    %128 = math.exp %127 : vector<8x128xf32>
    %cst_22 = arith.constant 1.000000e+00 : f32
    %129 = vector.broadcast %cst_22 : f32 to vector<8x128xf32>
    %130 = arith.addf %129, %128 : vector<8x128xf32>
    %131 = arith.divf %129, %130 : vector<8x128xf32>
    %132 = math.tanh %126 : vector<8x128xf32>
    %133 = vector.extract_strided_slice %131 {offsets = [0, 0], sizes = [8, 32], strides = [1, 1]} : vector<8x128xf32> to vector<8x32xf32>
    %134 = vector.extract_strided_slice %131 {offsets = [0, 32], sizes = [8, 32], strides = [1, 1]} : vector<8x128xf32> to vector<8x32xf32>
    %135 = vector.extract_strided_slice %132 {offsets = [0, 64], sizes = [8, 32], strides = [1, 1]} : vector<8x128xf32> to vector<8x32xf32>
    %136 = vector.extract_strided_slice %131 {offsets = [0, 96], sizes = [8, 32], strides = [1, 1]} : vector<8x128xf32> to vector<8x32xf32>
    %137 = arith.mulf %134, %120 : vector<8x32xf32>
    %138 = arith.mulf %133, %135 : vector<8x32xf32>
    %139 = arith.addf %137, %138 : vector<8x32xf32>
    %140 = math.tanh %139 : vector<8x32xf32>
    %141 = arith.mulf %136, %140 : vector<8x32xf32>
    %142 = vector.extract_strided_slice %5 {offsets = [56, 0], sizes = [8, 128], strides = [1, 1]} : vector<64x128xf32> to vector<8x128xf32>
    %143 = arith.truncf %141 : vector<8x32xf32> to vector<8x32xbf16>
    %cst_23 = arith.constant dense<0.000000e+00> : vector<8x128xf32>
    %144 = tpu.matmul %143, %6, %cst_23 {dimension_numbers = #tpu.dot_dimension_numbers<[1], [0], [0], [1], [0, 0, 1, 1], [], []>} : vector<8x32xbf16>, vector<32x128xbf16>, vector<8x128xf32> -> vector<8x128xf32>
    %145 = arith.addf %142, %144 : vector<8x128xf32>
    %146 = arith.negf %145 : vector<8x128xf32>
    %147 = math.exp %146 : vector<8x128xf32>
    %cst_24 = arith.constant 1.000000e+00 : f32
    %148 = vector.broadcast %cst_24 : f32 to vector<8x128xf32>
    %149 = arith.addf %148, %147 : vector<8x128xf32>
    %150 = arith.divf %148, %149 : vector<8x128xf32>
    %151 = math.tanh %145 : vector<8x128xf32>
    %152 = vector.extract_strided_slice %150 {offsets = [0, 0], sizes = [8, 32], strides = [1, 1]} : vector<8x128xf32> to vector<8x32xf32>
    %153 = vector.extract_strided_slice %150 {offsets = [0, 32], sizes = [8, 32], strides = [1, 1]} : vector<8x128xf32> to vector<8x32xf32>
    %154 = vector.extract_strided_slice %151 {offsets = [0, 64], sizes = [8, 32], strides = [1, 1]} : vector<8x128xf32> to vector<8x32xf32>
    %155 = vector.extract_strided_slice %150 {offsets = [0, 96], sizes = [8, 32], strides = [1, 1]} : vector<8x128xf32> to vector<8x32xf32>
    %156 = arith.mulf %153, %139 : vector<8x32xf32>
    %157 = arith.mulf %152, %154 : vector<8x32xf32>
    %158 = arith.addf %156, %157 : vector<8x32xf32>
    %159 = math.tanh %158 : vector<8x32xf32>
    %160 = arith.mulf %155, %159 : vector<8x32xf32>
    %161 = arith.truncf %160 : vector<8x32xf32> to vector<8x32xbf16>
    %c0_25 = arith.constant 0 : index
    %c0_26 = arith.constant 0 : index
    %162 = vector.load %arg4[%c0_25, %c0_26] : memref<32x128xbf16, #tpu.memory_space<vmem>>, vector<32x128xbf16>
    %cst_27 = arith.constant dense<0.000000e+00> : vector<8x128xf32>
    %163 = tpu.matmul %161, %162, %cst_27 {dimension_numbers = #tpu.dot_dimension_numbers<[1], [0], [0], [1], [0, 0, 1, 1], [], []>} : vector<8x32xbf16>, vector<32x128xbf16>, vector<8x128xf32> -> vector<8x128xf32>
    %c0_28 = arith.constant 0 : index
    %c0_29 = arith.constant 0 : index
    %164 = vector.load %arg5[%c0_28, %c0_29] : memref<1x128xf32, #tpu.memory_space<vmem>>, vector<1x128xf32>
    %165 = vector.broadcast %164 : vector<1x128xf32> to vector<8x128xf32>
    %166 = arith.addf %163, %165 : vector<8x128xf32>
    %c0_30 = arith.constant 0 : index
    %c0_31 = arith.constant 0 : index
    %167 = vector.load %arg6[%c0_30, %c0_31] : memref<8x128xf32, #tpu.memory_space<vmem>>, vector<8x128xf32>
    tpu.vector_store %arg6[%c0_30, %c0_31], %166 {strides = array<i32>} : memref<8x128xf32, #tpu.memory_space<vmem>>, vector<8x128xf32>,
    return
  }
}

</mosaic_0001>

<llo_original>
// kernel: tpu_custom_call.1
$region0: #{tpu_custom_call.1}
  #allocation0 [shape = 'u32[]', space=smem, size = 0x4, offset = 0x4, fixed_abs, tag = 'smem constant byte address 0x4 - core index']
  #allocation1 [shape = 'u32[144,128]{1,0:T(1,128)}', space=vmem, size = 0x12000, scoped, tag = 'internal scratch']
  %s0 = inlined_call_operand.vmem [shape: bf16[64,16], index: 0, kind: input, shape index: {}]
  %s1 = inlined_call_operand.vmem [shape: bf16[16,128], index: 1, kind: input, shape index: {}]
  %s2 = inlined_call_operand.vmem [shape: bf16[32,128], index: 2, kind: input, shape index: {}]
  %s3 = inlined_call_operand.vmem [shape: f32[1,128], index: 3, kind: input, shape index: {}]
  %s4 = inlined_call_operand.vmem [shape: bf16[32,128], index: 4, kind: input, shape index: {}]
  %s5 = inlined_call_operand.vmem [shape: f32[1,128], index: 5, kind: input, shape index: {}]
  %s6 = inlined_call_operand.hbm [shape: f32[8,128], index: 6, kind: output, shape index: {}]
  %s7 = sld [smem:[#allocation0]]
  $region34: #{tpu_custom_call.1} parent=0
    _
  %s9 = ssub.s32 1, %s7
  %s10 = scalar_select 0, %s9, %s7
  $region1: #{tpu_custom_call.1} parent=0
    #allocation2 [shape = 'u8[4096]{0}', space=vmem, size = 0x1000, scoped, tag = 'output window, operand 0, single buffered']
    #allocation3 [shape = 's32[1]{0}', space=sflag, size = 0x4, scoped, tag = 'scoped memory for tpu_custom_call.1']
    %11 = vsyncpa [#allocation3], 0
    // Predicated region
    $region2: #{tpu_custom_call.1} parent=1 // pred_check
      _
    $region3: #{tpu_custom_call.1} parent=1 // pred_check_branch
      %13 = sbr.rel (0) target = $region5
    $region4: #{tpu_custom_call.1} parent=1 // pred_region
      _
    $region5: #{tpu_custom_call.1} parent=1 // pred_fallthru
      _
    // Predicated region
    $region6: #{tpu_custom_call.1} parent=1 // pred_check
      _
    $region7: #{tpu_custom_call.1} parent=1 // pred_check_branch
      %15 = sbr.rel (0) target = $region9
    $region8: #{tpu_custom_call.1} parent=1 // pred_region
      _
    $region9: #{tpu_custom_call.1} parent=1 // pred_fallthru
      _
    // Predicated region
    $region10: #{tpu_custom_call.1} parent=1 // pred_check
      _
    $region11: #{tpu_custom_call.1} parent=1 // pred_check_branch
      %17 = sbr.rel (0) target = $region13
    $region12: #{tpu_custom_call.1} parent=1 // pred_region
      _
    $region13: #{tpu_custom_call.1} parent=1 // pred_fallthru
      _
    // Predicated region
    $region14: #{tpu_custom_call.1} parent=1 // pred_check
      _
    $region15: #{tpu_custom_call.1} parent=1 // pred_check_branch
      %19 = sbr.rel (0) target = $region17
    $region16: #{tpu_custom_call.1} parent=1 // pred_region
      _
    $region17: #{tpu_custom_call.1} parent=1 // pred_fallthru
      _
    // Predicated region
    $region18: #{tpu_custom_call.1} parent=1 // pred_check
      _
    $region19: #{tpu_custom_call.1} parent=1 // pred_check_branch
      %21 = sbr.rel (0) target = $region21
    $region20: #{tpu_custom_call.1} parent=1 // pred_region
      _
    $region21: #{tpu_custom_call.1} parent=1 // pred_fallthru
      _
    // Predicated region
    $region22: #{tpu_custom_call.1} parent=1 // pred_check
      _
    $region23: #{tpu_custom_call.1} parent=1 // pred_check_branch
      %23 = sbr.rel (0) target = $region25
    $region24: #{tpu_custom_call.1} parent=1 // pred_region
      _
    $region25: #{tpu_custom_call.1} parent=1 // pred_fallthru
      _
    %v25 = vld [vmem:[%s0] sm:$0xf]
    %v26 = vld [vmem:[%s0 + $0x4] sm:$0xf]
    %v27 = vld [vmem:[%s0 + $0x8] sm:$0xf]
    %v28 = vld [vmem:[%s0 + $0xc] sm:$0xf]
    %v29 = vld [vmem:[%s0 + $0x10] sm:$0xf]
    %v30 = vld [vmem:[%s0 + $0x14] sm:$0xf]
    %v31 = vld [vmem:[%s0 + $0x18] sm:$0xf]
    %v32 = vld [vmem:[%s0 + $0x1c] sm:$0xf]
    %v33 = vld [vmem:[%s1] sm:$0xf]
    %v34 = vld [vmem:[%s1 + $0x4] sm:$0xf]
    %v35 = vld [vmem:[%s3] sm:$0x1]
    %v37 = vlaneseq
    %v38 = vshrl.u32 %v37, 7
    %v39 = vsub.s32 0, %v38
    %v40 = vrot.slane %v35, %v39
    %v50 = vunpack.c.l.b16 %v25
    %v51 = vunpack.c.l.b16 %v26
    %v52 = vunpack.c.l.b16 %v27
    %v53 = vunpack.c.l.b16 %v28
    %v54 = vunpack.c.l.b16 %v29
    %v55 = vunpack.c.l.b16 %v30
    %v56 = vunpack.c.l.b16 %v31
    %v57 = vunpack.c.l.b16 %v32
    %v58 = vpack.c.b16 %v51, %v50
    %v59 = vpack.c.b16 %v53, %v52
    %v60 = vpack.c.b16 %v55, %v54
    %v61 = vpack.c.b16 %v57, %v56
    %v64 = vunpack.c.l.b16 %v33
    %v65 = vunpack.c.l.b16 %v34
    %v66 = vpack.c.b16 %v65, %v64
    %vm68 = vcmask 130048
    %v70 = vsel %vm68, %v58, 0
    %v73 = vsel %vm68, %v59, 0
    %v76 = vsel %vm68, %v60, 0
    %v79 = vsel %vm68, %v61, 0
    %81 = vmatprep.subr.bf16.mxu0 0
    %82 = vmatpush1.bf16.msra.mxu0 %v66
    %83 = vmatprep.subr.bf16.mxu0 0
    %84 = vmatpush1.bf16.msra.mxu0 0
    %85 = vmatprep.subr.bf16.mxu0 0
    %86 = vmatpush1.bf16.msra.mxu0 0
    %87 = vmatprep.subr.bf16.mxu0 0
    %88 = vmatpush1.bf16.msra.mxu0 0
    %89 = vmatprep.subr.bf16.mxu0 0
    %90 = vmatpush1.bf16.msra.mxu0 0
    %91 = vmatprep.subr.bf16.mxu0 0
    %92 = vmatpush1.bf16.msra.mxu0 0
    %93 = vmatprep.subr.bf16.mxu0 0
    %94 = vmatpush1.bf16.msra.mxu0 0
    %95 = vmatprep.subr.bf16.mxu0 0
    %96 = vmatpush1.bf16.msra.mxu0 0
    %97 = vmatprep.subr.bf16.mxu0 0
    %98 = vmatpush1.bf16.msra.mxu0 0
    %99 = vmatprep.subr.bf16.mxu0 0
    %100 = vmatpush1.bf16.msra.mxu0 0
    %101 = vmatprep.subr.bf16.mxu0 0
    %102 = vmatpush1.bf16.msra.mxu0 0
    %103 = vmatprep.subr.bf16.mxu0 0
    %104 = vmatpush1.bf16.msra.mxu0 0
    %105 = vmatprep.subr.bf16.mxu0 0
    %106 = vmatpush1.bf16.msra.mxu0 0
    %107 = vmatprep.subr.bf16.mxu0 0
    %108 = vmatpush1.bf16.msra.mxu0 0
    %109 = vmatprep.subr.bf16.mxu0 0
    %110 = vmatpush1.bf16.msra.mxu0 0
    %111 = vmatprep.subr.bf16.mxu0 0
    %112 = vmatpush1.bf16.msra.mxu0 0
    %113 = vmatprep.mubr.bf16.mxu0 0
    %114 = vmatmul.mubr.bf16.gmra.mrb[0].mxu0 %v70
    %v115 = vpop.f32.mrb[0].mxu0
    %v116 = vadd.f32 %v40, %v115
    %v117 = vpop.f32.mrb[0].mxu0
    %v118 = vpop.f32.mrb[0].mxu0
    %v119 = vadd.f32 %v40, %v118
    %v120 = vpop.f32.mrb[0].mxu0
    %121 = vmatprep.mubr.bf16.mxu0 0
    %122 = vmatmul.mubr.bf16.gmra.mrb[0].mxu0 %v73
    %v123 = vpop.f32.mrb[0].mxu0
    %v124 = vadd.f32 %v40, %v123
    %v125 = vpop.f32.mrb[0].mxu0
    %v126 = vpop.f32.mrb[0].mxu0
    %v127 = vadd.f32 %v40, %v126
    %v128 = vpop.f32.mrb[0].mxu0
    %129 = vmatprep.mubr.bf16.mxu0 0
    %130 = vmatmul.mubr.bf16.gmra.mrb[0].mxu0 %v76
    %v131 = vpop.f32.mrb[0].mxu0
    %v132 = vadd.f32 %v40, %v131
    %v133 = vpop.f32.mrb[0].mxu0
    %v134 = vpop.f32.mrb[0].mxu0
    %v135 = vadd.f32 %v40, %v134
    %v136 = vpop.f32.mrb[0].mxu0
    %137 = vmatprep.mubr.bf16.mxu0 0
    %138 = vmatmul.mubr.bf16.gmra.mrb[0].mxu0 %v79
    %v139 = vpop.f32.mrb[0].mxu0
    %v140 = vadd.f32 %v40, %v139
    %v141 = vpop.f32.mrb[0].mxu0
    %v142 = vpop.f32.mrb[0].mxu0
    %v143 = vadd.f32 %v40, %v142
    %v144 = vpop.f32.mrb[0].mxu0
    %145 = vdwg.mxu0
    %v146 = vld [vmem:[%s2] sm:$0xf]
    %v147 = vld [vmem:[%s2 + $0x4] sm:$0xf]
    %v148 = vld [vmem:[%s2 + $0x8] sm:$0xf]
    %v149 = vld [vmem:[%s2 + $0xc] sm:$0xf]
    %v154 = vunpack.c.l.b16 %v146
    %v155 = vunpack.c.l.b16 %v147
    %v156 = vunpack.c.l.b16 %v148
    %v157 = vunpack.c.l.b16 %v149
    %v158 = vpack.c.b16 %v155, %v154
    %v159 = vpack.c.b16 %v157, %v156
    %vm162 = vcmask 261120
    %v164 = vsel %vm162, 0, 0
    %166 = vmatprep.subr.bf16.mxu0 0
    %167 = vmatpush1.bf16.msra.mxu0 %v158
    %168 = vmatprep.subr.bf16.mxu0 0
    %169 = vmatpush1.bf16.msra.mxu0 %v159
    %170 = vmatprep.subr.bf16.mxu0 0
    %171 = vmatpush1.bf16.msra.mxu0 0
    %172 = vmatprep.subr.bf16.mxu0 0
    %173 = vmatpush1.bf16.msra.mxu0 0
    %174 = vmatprep.subr.bf16.mxu0 0
    %175 = vmatpush1.bf16.msra.mxu0 0
    %176 = vmatprep.subr.bf16.mxu0 0
    %177 = vmatpush1.bf16.msra.mxu0 0
    %178 = vmatprep.subr.bf16.mxu0 0
    %179 = vmatpush1.bf16.msra.mxu0 0
    %180 = vmatprep.subr.bf16.mxu0 0
    %181 = vmatpush1.bf16.msra.mxu0 0
    %182 = vmatprep.subr.bf16.mxu0 0
    %183 = vmatpush1.bf16.msra.mxu0 0
    %184 = vmatprep.subr.bf16.mxu0 0
    %185 = vmatpush1.bf16.msra.mxu0 0
    %186 = vmatprep.subr.bf16.mxu0 0
    %187 = vmatpush1.bf16.msra.mxu0 0
    %188 = vmatprep.subr.bf16.mxu0 0
    %189 = vmatpush1.bf16.msra.mxu0 0
    %190 = vmatprep.subr.bf16.mxu0 0
    %191 = vmatpush1.bf16.msra.mxu0 0
    %192 = vmatprep.subr.bf16.mxu0 0
    %193 = vmatpush1.bf16.msra.mxu0 0
    %194 = vmatprep.subr.bf16.mxu0 0
    %195 = vmatpush1.bf16.msra.mxu0 0
    %196 = vmatprep.subr.bf16.mxu0 0
    %197 = vmatpush1.bf16.msra.mxu0 0
    %198 = vmatprep.mubr.bf16.mxu0 0
    %199 = vmatmul.mubr.bf16.gmra.mrb[0].mxu0 %v164
    %v200 = vpop.f32.mrb[0].mxu0
    %v201 = vadd.f32 0.0, %v200
    %v202 = vpop.f32.mrb[0].mxu0
    %v203 = vpop.f32.mrb[0].mxu0
    %v204 = vpop.f32.mrb[0].mxu0
    %205 = vdwg.mxu0
    %v206 = vadd.f32 %v116, %v201
    %v207 = vxor.u32 %v206, 2147483648
    %v208 = vmul.f32 %v207, 1.442695
    %v209 = vpow.pop %v208
    %v210 = vadd.f32 %v209, 1.0
    %v211 = vrcp.pop %v210
    %v212 = vmul.f32 1.0, %v211
    %v213 = vtanh.pop %v206
    %v214 = vmul.f32 %v212, 0.0
    %216 = vrot.lane.b32.xlu0 %v213, 64
    %v217 = vpop.permute.xlu0 %216
    %v219 = vmul.f32 %v212, %v217
    %221 = vrot.lane.b32.xlu0 %v219, 32
    %v222 = vpop.permute.xlu0 %221
    %v224 = vadd.f32 %v214, %v222
    %v225 = vtanh.pop %v224
    %227 = vrot.lane.b32.xlu0 %v225, 64
    %v228 = vpop.permute.xlu0 %227
    %v230 = vmul.f32 %v212, %v228
    %v231 = vpack.c.bf16 %v230, %v230
    %233 = vrot.lane.b32.xlu0 %v231, 32
    %v234 = vpop.permute.xlu0 %233
    %v236 = vsel %vm162, %v234, 0
    %238 = vmatprep.subr.bf16.mxu0 0
    %239 = vmatpush1.bf16.msra.mxu0 %v158
    %240 = vmatprep.subr.bf16.mxu0 0
    %241 = vmatpush1.bf16.msra.mxu0 %v159
    %242 = vmatprep.subr.bf16.mxu0 0
    %243 = vmatpush1.bf16.msra.mxu0 0
    %244 = vmatprep.subr.bf16.mxu0 0
    %245 = vmatpush1.bf16.msra.mxu0 0
    %246 = vmatprep.subr.bf16.mxu0 0
    %247 = vmatpush1.bf16.msra.mxu0 0
    %248 = vmatprep.subr.bf16.mxu0 0
    %249 = vmatpush1.bf16.msra.mxu0 0
    %250 = vmatprep.subr.bf16.mxu0 0
    %251 = vmatpush1.bf16.msra.mxu0 0
    %252 = vmatprep.subr.bf16.mxu0 0
    %253 = vmatpush1.bf16.msra.mxu0 0
    %254 = vmatprep.subr.bf16.mxu0 0
    %255 = vmatpush1.bf16.msra.mxu0 0
    %256 = vmatprep.subr.bf16.mxu0 0
    %257 = vmatpush1.bf16.msra.mxu0 0
    %258 = vmatprep.subr.bf16.mxu0 0
    %259 = vmatpush1.bf16.msra.mxu0 0
    %260 = vmatprep.subr.bf16.mxu0 0
    %261 = vmatpush1.bf16.msra.mxu0 0
    %262 = vmatprep.subr.bf16.mxu0 0
    %263 = vmatpush1.bf16.msra.mxu0 0
    %264 = vmatprep.subr.bf16.mxu0 0
    %265 = vmatpush1.bf16.msra.mxu0 0
    %266 = vmatprep.subr.bf16.mxu0 0
    %267 = vmatpush1.bf16.msra.mxu0 0
    %268 = vmatprep.subr.bf16.mxu0 0
    %269 = vmatpush1.bf16.msra.mxu0 0
    %270 = vmatprep.mubr.bf16.mxu0 0
    %271 = vmatmul.mubr.bf16.gmra.mrb[0].mxu0 %v236
    %v272 = vpop.f32.mrb[0].mxu0
    %v273 = vadd.f32 0.0, %v272
    %v274 = vpop.f32.mrb[0].mxu0
    %v275 = vpop.f32.mrb[0].mxu0
    %v276 = vpop.f32.mrb[0].mxu0
    %277 = vdwg.mxu0
    %v278 = vadd.f32 %v119, %v273
    %v279 = vxor.u32 %v278, 2147483648
    %v280 = vmul.f32 %v279, 1.442695
    %v281 = vpow.pop %v280
    %v282 = vadd.f32 %v281, 1.0
    %v283 = vrcp.pop %v282
    %v284 = vmul.f32 1.0, %v283
    %v285 = vtanh.pop %v278
    %v286 = vmul.f32 %v284, %v224
    %288 = vrot.lane.b32.xlu0 %v285, 64
    %v289 = vpop.permute.xlu0 %288
    %v291 = vmul.f32 %v284, %v289
    %293 = vrot.lane.b32.xlu0 %v291, 32
    %v294 = vpop.permute.xlu0 %293
    %v296 = vadd.f32 %v286, %v294
    %v297 = vtanh.pop %v296
    %299 = vrot.lane.b32.xlu0 %v297, 64
    %v300 = vpop.permute.xlu0 %299
    %v302 = vmul.f32 %v284, %v300
    %v303 = vpack.c.bf16 %v302, %v302
    %305 = vrot.lane.b32.xlu0 %v303, 32
    %v306 = vpop.permute.xlu0 %305
    %v308 = vsel %vm162, %v306, 0
    %310 = vmatprep.subr.bf16.mxu0 0
    %311 = vmatpush1.bf16.msra.mxu0 %v158
    %312 = vmatprep.subr.bf16.mxu0 0
    %313 = vmatpush1.bf16.msra.mxu0 %v159
    %314 = vmatprep.subr.bf16.mxu0 0
    %315 = vmatpush1.bf16.msra.mxu0 0
    %316 = vmatprep.subr.bf16.mxu0 0
    %317 = vmatpush1.bf16.msra.mxu0 0
    %318 = vmatprep.subr.bf16.mxu0 0
    %319 = vmatpush1.bf16.msra.mxu0 0
    %320 = vmatprep.subr.bf16.mxu0 0
    %321 = vmatpush1.bf16.msra.mxu0 0
    %322 = vmatprep.subr.bf16.mxu0 0
    %323 = vmatpush1.bf16.msra.mxu0 0
    %324 = vmatprep.subr.bf16.mxu0 0
    %325 = vmatpush1.bf16.msra.mxu0 0
    %326 = vmatprep.subr.bf16.mxu0 0
    %327 = vmatpush1.bf16.msra.mxu0 0
    %328 = vmatprep.subr.bf16.mxu0 0
    %329 = vmatpush1.bf16.msra.mxu0 0
    %330 = vmatprep.subr.bf16.mxu0 0
    %331 = vmatpush1.bf16.msra.mxu0 0
    %332 = vmatprep.subr.bf16.mxu0 0
    %333 = vmatpush1.bf16.msra.mxu0 0
    %334 = vmatprep.subr.bf16.mxu0 0
    %335 = vmatpush1.bf16.msra.mxu0 0
    %336 = vmatprep.subr.bf16.mxu0 0
    %337 = vmatpush1.bf16.msra.mxu0 0
    %338 = vmatprep.subr.bf16.mxu0 0
    %339 = vmatpush1.bf16.msra.mxu0 0
    %340 = vmatprep.subr.bf16.mxu0 0
    %341 = vmatpush1.bf16.msra.mxu0 0
    %342 = vmatprep.mubr.bf16.mxu0 0
    %343 = vmatmul.mubr.bf16.gmra.mrb[0].mxu0 %v308
    %v344 = vpop.f32.mrb[0].mxu0
    %v345 = vadd.f32 0.0, %v344
    %v346 = vpop.f32.mrb[0].mxu0
    %v347 = vpop.f32.mrb[0].mxu0
    %v348 = vpop.f32.mrb[0].mxu0
    %349 = vdwg.mxu0
    %v350 = vadd.f32 %v124, %v345
    %v351 = vxor.u32 %v350, 2147483648
    %v352 = vmul.f32 %v351, 1.442695
    %v353 = vpow.pop %v352
    %v354 = vadd.f32 %v353, 1.0
    %v355 = vrcp.pop %v354
    %v356 = vmul.f32 1.0, %v355
    %v357 = vtanh.pop %v350
    %v358 = vmul.f32 %v356, %v296
    %360 = vrot.lane.b32.xlu0 %v357, 64
    %v361 = vpop.permute.xlu0 %360
    %v363 = vmul.f32 %v356, %v361
    %365 = vrot.lane.b32.xlu0 %v363, 32
    %v366 = vpop.permute.xlu0 %365
    %v368 = vadd.f32 %v358, %v366
    %v369 = vtanh.pop %v368
    %371 = vrot.lane.b32.xlu0 %v369, 64
    %v372 = vpop.permute.xlu0 %371
    %v374 = vmul.f32 %v356, %v372
    %v375 = vpack.c.bf16 %v374, %v374
    %377 = vrot.lane.b32.xlu0 %v375, 32
    %v378 = vpop.permute.xlu0 %377
    %v380 = vsel %vm162, %v378, 0
    %382 = vmatprep.subr.bf16.mxu0 0
    %383 = vmatpush1.bf16.msra.mxu0 %v158
    %384 = vmatprep.subr.bf16.mxu0 0
    %385 = vmatpush1.bf16.msra.mxu0 %v159
    %386 = vmatprep.subr.bf16.mxu0 0
    %387 = vmatpush1.bf16.msra.mxu0 0
    %388 = vmatprep.subr.bf16.mxu0 0
    %389 = vmatpush1.bf16.msra.mxu0 0
    %390 = vmatprep.subr.bf16.mxu0 0
    %391 = vmatpush1.bf16.msra.mxu0 0
    %392 = vmatprep.subr.bf16.mxu0 0
    %393 = vmatpush1.bf16.msra.mxu0 0
    %394 = vmatprep.subr.bf16.mxu0 0
    %395 = vmatpush1.bf16.msra.mxu0 0
    %396 = vmatprep.subr.bf16.mxu0 0
    %397 = vmatpush1.bf16.msra.mxu0 0
    %398 = vmatprep.subr.bf16.mxu0 0
    %399 = vmatpush1.bf16.msra.mxu0 0
    %400 = vmatprep.subr.bf16.mxu0 0
    %401 = vmatpush1.bf16.msra.mxu0 0
    %402 = vmatprep.subr.bf16.mxu0 0
    %403 = vmatpush1.bf16.msra.mxu0 0
    %404 = vmatprep.subr.bf16.mxu0 0
    %405 = vmatpush1.bf16.msra.mxu0 0
    %406 = vmatprep.subr.bf16.mxu0 0
    %407 = vmatpush1.bf16.msra.mxu0 0
    %408 = vmatprep.subr.bf16.mxu0 0
    %409 = vmatpush1.bf16.msra.mxu0 0
    %410 = vmatprep.subr.bf16.mxu0 0
    %411 = vmatpush1.bf16.msra.mxu0 0
    %412 = vmatprep.subr.bf16.mxu0 0
    %413 = vmatpush1.bf16.msra.mxu0 0
    %414 = vmatprep.mubr.bf16.mxu0 0
    %415 = vmatmul.mubr.bf16.gmra.mrb[0].mxu0 %v380
    %v416 = vpop.f32.mrb[0].mxu0
    %v417 = vadd.f32 0.0, %v416
    %v418 = vpop.f32.mrb[0].mxu0
    %v419 = vpop.f32.mrb[0].mxu0
    %v420 = vpop.f32.mrb[0].mxu0
    %421 = vdwg.mxu0
    %v422 = vadd.f32 %v127, %v417
    %v423 = vxor.u32 %v422, 2147483648
    %v424 = vmul.f32 %v423, 1.442695
    %v425 = vpow.pop %v424
    %v426 = vadd.f32 %v425, 1.0
    %v427 = vrcp.pop %v426
    %v428 = vmul.f32 1.0, %v427
    %v429 = vtanh.pop %v422
    %v430 = vmul.f32 %v428, %v368
    %432 = vrot.lane.b32.xlu0 %v429, 64
    %v433 = vpop.permute.xlu0 %432
    %v435 = vmul.f32 %v428, %v433
    %437 = vrot.lane.b32.xlu0 %v435, 32
    %v438 = vpop.permute.xlu0 %437
    %v440 = vadd.f32 %v430, %v438
    %v441 = vtanh.pop %v440
    %443 = vrot.lane.b32.xlu0 %v441, 64
    %v444 = vpop.permute.xlu0 %443
    %v446 = vmul.f32 %v428, %v444
    %v447 = vpack.c.bf16 %v446, %v446
    %449 = vrot.lane.b32.xlu0 %v447, 32
    %v450 = vpop.permute.xlu0 %449
    %v452 = vsel %vm162, %v450, 0
    %454 = vmatprep.subr.bf16.mxu0 0
    %455 = vmatpush1.bf16.msra.mxu0 %v158
    %456 = vmatprep.subr.bf16.mxu0 0
    %457 = vmatpush1.bf16.msra.mxu0 %v159
    %458 = vmatprep.subr.bf16.mxu0 0
    %459 = vmatpush1.bf16.msra.mxu0 0
    %460 = vmatprep.subr.bf16.mxu0 0
    %461 = vmatpush1.bf16.msra.mxu0 0
    %462 = vmatprep.subr.bf16.mxu0 0
    %463 = vmatpush1.bf16.msra.mxu0 0
    %464 = vmatprep.subr.bf16.mxu0 0
    %465 = vmatpush1.bf16.msra.mxu0 0
    %466 = vmatprep.subr.bf16.mxu0 0
    %467 = vmatpush1.bf16.msra.mxu0 0
    %468 = vmatprep.subr.bf16.mxu0 0
    %469 = vmatpush1.bf16.msra.mxu0 0
    %470 = vmatprep.subr.bf16.mxu0 0
    %471 = vmatpush1.bf16.msra.mxu0 0
    %472 = vmatprep.subr.bf16.mxu0 0
    %473 = vmatpush1.bf16.msra.mxu0 0
    %474 = vmatprep.subr.bf16.mxu0 0
    %475 = vmatpush1.bf16.msra.mxu0 0
    %476 = vmatprep.subr.bf16.mxu0 0
    %477 = vmatpush1.bf16.msra.mxu0 0
    %478 = vmatprep.subr.bf16.mxu0 0
    %479 = vmatpush1.bf16.msra.mxu0 0
    %480 = vmatprep.subr.bf16.mxu0 0
    %481 = vmatpush1.bf16.msra.mxu0 0
    %482 = vmatprep.subr.bf16.mxu0 0
    %483 = vmatpush1.bf16.msra.mxu0 0
    %484 = vmatprep.subr.bf16.mxu0 0
    %485 = vmatpush1.bf16.msra.mxu0 0
    %486 = vmatprep.mubr.bf16.mxu0 0
    %487 = vmatmul.mubr.bf16.gmra.mrb[0].mxu0 %v452
    %v488 = vpop.f32.mrb[0].mxu0
    %v489 = vadd.f32 0.0, %v488
    %v490 = vpop.f32.mrb[0].mxu0
    %v491 = vpop.f32.mrb[0].mxu0
    %v492 = vpop.f32.mrb[0].mxu0
    %493 = vdwg.mxu0
    %v494 = vadd.f32 %v132, %v489
    %v495 = vxor.u32 %v494, 2147483648
    %v496 = vmul.f32 %v495, 1.442695
    %v497 = vpow.pop %v496
    %v498 = vadd.f32 %v497, 1.0
    %v499 = vrcp.pop %v498
    %v500 = vmul.f32 1.0, %v499
    %v501 = vtanh.pop %v494
    %v502 = vmul.f32 %v500, %v440
    %504 = vrot.lane.b32.xlu0 %v501, 64
    %v505 = vpop.permute.xlu0 %504
    %v507 = vmul.f32 %v500, %v505
    %509 = vrot.lane.b32.xlu0 %v507, 32
    %v510 = vpop.permute.xlu0 %509
    %v512 = vadd.f32 %v502, %v510
    %v513 = vtanh.pop %v512
    %515 = vrot.lane.b32.xlu0 %v513, 64
    %v516 = vpop.permute.xlu0 %515
    %v518 = vmul.f32 %v500, %v516
    %v519 = vpack.c.bf16 %v518, %v518
    %521 = vrot.lane.b32.xlu0 %v519, 32
    %v522 = vpop.permute.xlu0 %521
    %v524 = vsel %vm162, %v522, 0
    %526 = vmatprep.subr.bf16.mxu0 0
    %527 = vmatpush1.bf16.msra.mxu0 %v158
    %528 = vmatprep.subr.bf16.mxu0 0
    %529 = vmatpush1.bf16.msra.mxu0 %v159
    %530 = vmatprep.subr.bf16.mxu0 0
    %531 = vmatpush1.bf16.msra.mxu0 0
    %532 = vmatprep.subr.bf16.mxu0 0
    %533 = vmatpush1.bf16.msra.mxu0 0
    %534 = vmatprep.subr.bf16.mxu0 0
    %535 = vmatpush1.bf16.msra.mxu0 0
    %536 = vmatprep.subr.bf16.mxu0 0
    %537 = vmatpush1.bf16.msra.mxu0 0
    %538 = vmatprep.subr.bf16.mxu0 0
    %539 = vmatpush1.bf16.msra.mxu0 0
    %540 = vmatprep.subr.bf16.mxu0 0
    %541 = vmatpush1.bf16.msra.mxu0 0
    %542 = vmatprep.subr.bf16.mxu0 0
    %543 = vmatpush1.bf16.msra.mxu0 0
    %544 = vmatprep.subr.bf16.mxu0 0
    %545 = vmatpush1.bf16.msra.mxu0 0
    %546 = vmatprep.subr.bf16.mxu0 0
    %547 = vmatpush1.bf16.msra.mxu0 0
    %548 = vmatprep.subr.bf16.mxu0 0
    %549 = vmatpush1.bf16.msra.mxu0 0
    %550 = vmatprep.subr.bf16.mxu0 0
    %551 = vmatpush1.bf16.msra.mxu0 0
    %552 = vmatprep.subr.bf16.mxu0 0
    %553 = vmatpush1.bf16.msra.mxu0 0
    %554 = vmatprep.subr.bf16.mxu0 0
    %555 = vmatpush1.bf16.msra.mxu0 0
    %556 = vmatprep.subr.bf16.mxu0 0
    %557 = vmatpush1.bf16.msra.mxu0 0
    %558 = vmatprep.mubr.bf16.mxu0 0
    %559 = vmatmul.mubr.bf16.gmra.mrb[0].mxu0 %v524
    %v560 = vpop.f32.mrb[0].mxu0
    %v561 = vadd.f32 0.0, %v560
    %v562 = vpop.f32.mrb[0].mxu0
    %v563 = vpop.f32.mrb[0].mxu0
    %v564 = vpop.f32.mrb[0].mxu0
    %565 = vdwg.mxu0
    %v566 = vadd.f32 %v135, %v561
    %v567 = vxor.u32 %v566, 2147483648
    %v568 = vmul.f32 %v567, 1.442695
    %v569 = vpow.pop %v568
    %v570 = vadd.f32 %v569, 1.0
    %v571 = vrcp.pop %v570
    %v572 = vmul.f32 1.0, %v571
    %v573 = vtanh.pop %v566
    %v574 = vmul.f32 %v572, %v512
    %576 = vrot.lane.b32.xlu0 %v573, 64
    %v577 = vpop.permute.xlu0 %576
    %v579 = vmul.f32 %v572, %v577
    %581 = vrot.lane.b32.xlu0 %v579, 32
    %v582 = vpop.permute.xlu0 %581
    %v584 = vadd.f32 %v574, %v582
    %v585 = vtanh.pop %v584
    %587 = vrot.lane.b32.xlu0 %v585, 64
    %v588 = vpop.permute.xlu0 %587
    %v590 = vmul.f32 %v572, %v588
    %v591 = vpack.c.bf16 %v590, %v590
    %593 = vrot.lane.b32.xlu0 %v591, 32
    %v594 = vpop.permute.xlu0 %593
    %v596 = vsel %vm162, %v594, 0
    %598 = vmatprep.subr.bf16.mxu0 0
    %599 = vmatpush1.bf16.msra.mxu0 %v158
    %600 = vmatprep.subr.bf16.mxu0 0
    %601 = vmatpush1.bf16.msra.mxu0 %v159
    %602 = vmatprep.subr.bf16.mxu0 0
    %603 = vmatpush1.bf16.msra.mxu0 0
    %604 = vmatprep.subr.bf16.mxu0 0
    %605 = vmatpush1.bf16.msra.mxu0 0
    %606 = vmatprep.subr.bf16.mxu0 0
    %607 = vmatpush1.bf16.msra.mxu0 0
    %608 = vmatprep.subr.bf16.mxu0 0
    %609 = vmatpush1.bf16.msra.mxu0 0
    %610 = vmatprep.subr.bf16.mxu0 0
    %611 = vmatpush1.bf16.msra.mxu0 0
    %612 = vmatprep.subr.bf16.mxu0 0
    %613 = vmatpush1.bf16.msra.mxu0 0
    %614 = vmatprep.subr.bf16.mxu0 0
    %615 = vmatpush1.bf16.msra.mxu0 0
    %616 = vmatprep.subr.bf16.mxu0 0
    %617 = vmatpush1.bf16.msra.mxu0 0
    %618 = vmatprep.subr.bf16.mxu0 0
    %619 = vmatpush1.bf16.msra.mxu0 0
    %620 = vmatprep.subr.bf16.mxu0 0
    %621 = vmatpush1.bf16.msra.mxu0 0
    %622 = vmatprep.subr.bf16.mxu0 0
    %623 = vmatpush1.bf16.msra.mxu0 0
    %624 = vmatprep.subr.bf16.mxu0 0
    %625 = vmatpush1.bf16.msra.mxu0 0
    %626 = vmatprep.subr.bf16.mxu0 0
    %627 = vmatpush1.bf16.msra.mxu0 0
    %628 = vmatprep.subr.bf16.mxu0 0
    %629 = vmatpush1.bf16.msra.mxu0 0
    %630 = vmatprep.mubr.bf16.mxu0 0
    %631 = vmatmul.mubr.bf16.gmra.mrb[0].mxu0 %v596
    %v632 = vpop.f32.mrb[0].mxu0
    %v633 = vadd.f32 0.0, %v632
    %v634 = vpop.f32.mrb[0].mxu0
    %v635 = vpop.f32.mrb[0].mxu0
    %v636 = vpop.f32.mrb[0].mxu0
    %637 = vdwg.mxu0
    %v638 = vadd.f32 %v140, %v633
    %v639 = vxor.u32 %v638, 2147483648
    %v640 = vmul.f32 %v639, 1.442695
    %v641 = vpow.pop %v640
    %v642 = vadd.f32 %v641, 1.0
    %v643 = vrcp.pop %v642
    %v644 = vmul.f32 1.0, %v643
    %v645 = vtanh.pop %v638
    %v646 = vmul.f32 %v644, %v584
    %648 = vrot.lane.b32.xlu0 %v645, 64
    %v649 = vpop.permute.xlu0 %648
    %v651 = vmul.f32 %v644, %v649
    %653 = vrot.lane.b32.xlu0 %v651, 32
    %v654 = vpop.permute.xlu0 %653
    %v656 = vadd.f32 %v646, %v654
    %v657 = vtanh.pop %v656
    %659 = vrot.lane.b32.xlu0 %v657, 64
    %v660 = vpop.permute.xlu0 %659
    %v662 = vmul.f32 %v644, %v660
    %v663 = vpack.c.bf16 %v662, %v662
    %665 = vrot.lane.b32.xlu0 %v663, 32
    %v666 = vpop.permute.xlu0 %665
    %v668 = vsel %vm162, %v666, 0
    %670 = vmatprep.subr.bf16.mxu0 0
    %671 = vmatpush1.bf16.msra.mxu0 %v158
    %672 = vmatprep.subr.bf16.mxu0 0
    %673 = vmatpush1.bf16.msra.mxu0 %v159
    %674 = vmatprep.subr.bf16.mxu0 0
    %675 = vmatpush1.bf16.msra.mxu0 0
    %676 = vmatprep.subr.bf16.mxu0 0
    %677 = vmatpush1.bf16.msra.mxu0 0
    %678 = vmatprep.subr.bf16.mxu0 0
    %679 = vmatpush1.bf16.msra.mxu0 0
    %680 = vmatprep.subr.bf16.mxu0 0
    %681 = vmatpush1.bf16.msra.mxu0 0
    %682 = vmatprep.subr.bf16.mxu0 0
    %683 = vmatpush1.bf16.msra.mxu0 0
    %684 = vmatprep.subr.bf16.mxu0 0
    %685 = vmatpush1.bf16.msra.mxu0 0
    %686 = vmatprep.subr.bf16.mxu0 0
    %687 = vmatpush1.bf16.msra.mxu0 0
    %688 = vmatprep.subr.bf16.mxu0 0
    %689 = vmatpush1.bf16.msra.mxu0 0
    %690 = vmatprep.subr.bf16.mxu0 0
    %691 = vmatpush1.bf16.msra.mxu0 0
    %692 = vmatprep.subr.bf16.mxu0 0
    %693 = vmatpush1.bf16.msra.mxu0 0
    %694 = vmatprep.subr.bf16.mxu0 0
    %695 = vmatpush1.bf16.msra.mxu0 0
    %696 = vmatprep.subr.bf16.mxu0 0
    %697 = vmatpush1.bf16.msra.mxu0 0
    %698 = vmatprep.subr.bf16.mxu0 0
    %699 = vmatpush1.bf16.msra.mxu0 0
    %700 = vmatprep.subr.bf16.mxu0 0
    %701 = vmatpush1.bf16.msra.mxu0 0
    %702 = vmatprep.mubr.bf16.mxu0 0
    %703 = vmatmul.mubr.bf16.gmra.mrb[0].mxu0 %v668
    %v704 = vpop.f32.mrb[0].mxu0
    %v705 = vadd.f32 0.0, %v704
    %v706 = vpop.f32.mrb[0].mxu0
    %v707 = vpop.f32.mrb[0].mxu0
    %v708 = vpop.f32.mrb[0].mxu0
    %709 = vdwg.mxu0
    %v710 = vadd.f32 %v143, %v705
    %v711 = vxor.u32 %v710, 2147483648
    %v712 = vmul.f32 %v711, 1.442695
    %v713 = vpow.pop %v712
    %v714 = vadd.f32 %v713, 1.0
    %v715 = vrcp.pop %v714
    %v716 = vmul.f32 1.0, %v715
    %v717 = vtanh.pop %v710
    %v718 = vmul.f32 %v716, %v656
    %720 = vrot.lane.b32.xlu0 %v717, 64
    %v721 = vpop.permute.xlu0 %720
    %v723 = vmul.f32 %v716, %v721
    %725 = vrot.lane.b32.xlu0 %v723, 32
    %v726 = vpop.permute.xlu0 %725
    %v728 = vadd.f32 %v718, %v726
    %v729 = vtanh.pop %v728
    %731 = vrot.lane.b32.xlu0 %v729, 64
    %v732 = vpop.permute.xlu0 %731
    %v734 = vmul.f32 %v716, %v732
    %v735 = vpack.c.bf16 %v734, %v734
    %v736 = vld [vmem:[%s4] sm:$0xf]
    %v737 = vld [vmem:[%s4 + $0x4] sm:$0xf]
    %v738 = vld [vmem:[%s4 + $0x8] sm:$0xf]
    %v739 = vld [vmem:[%s4 + $0xc] sm:$0xf]
    %v740 = vld [vmem:[%s5] sm:$0x1]
    %v742 = vlaneseq
    %v743 = vshrl.u32 %v742, 7
    %v744 = vsub.s32 0, %v743
    %v745 = vrot.slane %v740, %v744
    %748 = vrot.lane.b32.xlu0 %v735, 32
    %v749 = vpop.permute.xlu0 %748
    %v754 = vunpack.c.l.b16 %v736
    %v755 = vunpack.c.l.b16 %v737
    %v756 = vunpack.c.l.b16 %v738
    %v757 = vunpack.c.l.b16 %v739
    %v758 = vpack.c.b16 %v755, %v754
    %v759 = vpack.c.b16 %v757, %v756
    %v763 = vsel %vm162, %v749, 0
    %765 = vmatprep.subr.bf16.mxu0 0
    %766 = vmatpush1.bf16.msra.mxu0 %v758
    %767 = vmatprep.subr.bf16.mxu0 0
    %768 = vmatpush1.bf16.msra.mxu0 %v759
    %769 = vmatprep.subr.bf16.mxu0 0
    %770 = vmatpush1.bf16.msra.mxu0 0
    %771 = vmatprep.subr.bf16.mxu0 0
    %772 = vmatpush1.bf16.msra.mxu0 0
    %773 = vmatprep.subr.bf16.mxu0 0
    %774 = vmatpush1.bf16.msra.mxu0 0
    %775 = vmatprep.subr.bf16.mxu0 0
    %776 = vmatpush1.bf16.msra.mxu0 0
    %777 = vmatprep.subr.bf16.mxu0 0
    %778 = vmatpush1.bf16.msra.mxu0 0
    %779 = vmatprep.subr.bf16.mxu0 0
    %780 = vmatpush1.bf16.msra.mxu0 0
    %781 = vmatprep.subr.bf16.mxu0 0
    %782 = vmatpush1.bf16.msra.mxu0 0
    %783 = vmatprep.subr.bf16.mxu0 0
    %784 = vmatpush1.bf16.msra.mxu0 0
    %785 = vmatprep.subr.bf16.mxu0 0
    %786 = vmatpush1.bf16.msra.mxu0 0
    %787 = vmatprep.subr.bf16.mxu0 0
    %788 = vmatpush1.bf16.msra.mxu0 0
    %789 = vmatprep.subr.bf16.mxu0 0
    %790 = vmatpush1.bf16.msra.mxu0 0
    %791 = vmatprep.subr.bf16.mxu0 0
    %792 = vmatpush1.bf16.msra.mxu0 0
    %793 = vmatprep.subr.bf16.mxu0 0
    %794 = vmatpush1.bf16.msra.mxu0 0
    %795 = vmatprep.subr.bf16.mxu0 0
    %796 = vmatpush1.bf16.msra.mxu0 0
    %797 = vmatprep.mubr.bf16.mxu0 0
    %798 = vmatmul.mubr.bf16.gmra.mrb[0].mxu0 %v763
    %v799 = vpop.f32.mrb[0].mxu0
    %v800 = vadd.f32 %v745, %v799
    %v801 = vpop.f32.mrb[0].mxu0
    %v802 = vpop.f32.mrb[0].mxu0
    %v803 = vpop.f32.mrb[0].mxu0
    %804 = vdwg.mxu0
    %805 = vst [vmem:[#allocation2] sm:$0xff] %v800
    // Predicated region
    $region26: #{tpu_custom_call.1} parent=1 // pred_check
      _
    $region27: #{tpu_custom_call.1} parent=1 // pred_check_branch
      %807 = sbr.rel (0) target = $region29
    $region28: #{tpu_custom_call.1} parent=1 // pred_region
      %s809 = ssub.s32 128, 128
      %810 = vsyncadd [#allocation3], %s809
      %s812 = sshll.u32 [#allocation2], 4
      %s813 = int_to_ptr.vmem [resolvable:$true] %s812
      %815 = dma.vmem_to_hbm [thread:$0]  %s813, 128, %s6, [#allocation3]
    $region29: #{tpu_custom_call.1} parent=1 // pred_fallthru
      _
    // Predicated region
    $region30: #{tpu_custom_call.1} parent=1 // pred_check
      _
    $region31: #{tpu_custom_call.1} parent=1 // pred_check_branch
      %817 = sbr.rel (0) target = $region33
    $region32: #{tpu_custom_call.1} parent=1 // pred_region
      %818 = dma.done [#allocation3], 128
    $region33: #{tpu_custom_call.1} parent=1 // pred_fallthru
      _
    %819 = vsyncpa [#allocation3], 1

</llo_original>
